<compile_context>
chip_gen: v7x
topology: tpu7x:2x2x1
jax: 0.10.0
libtpu: 0.0.40
codegen_flags: <defaults>
</compile_context>

<pallas_src>
import functools

import jax
import jax.numpy as jnp
from jax.experimental import pallas as pl
from jax.experimental.pallas import tpu as pltpu


def _fused_mlp_kernel(x_ref, w1_ref, b1_ref, w2_ref, b2_ref, o_ref):
    """One lane-dense batch tile:
       o = W2bd @ sigmoid(W1cat @ x + b1) + b2, shapes (rows, TILE_B)."""
    x = x_ref[...].astype(jnp.float32)                       # (C, TB)
    h = jnp.dot(w1_ref[...], x,
                preferred_element_type=jnp.float32) + b1_ref[...]   # (3H, TB)
    h = jax.nn.sigmoid(h)                                    # EUP pass, full lanes
    y = jnp.dot(w2_ref[...], h,
                preferred_element_type=jnp.float32) + b2_ref[...]   # (3K, TB)
    o_ref[...] = y.astype(o_ref.dtype)                       # dense 128-lane store


def _fuse_params(w1s, b1s, w2s, b2s):
    """Fuse 3 independent heads into one pair of (layer-1, layer-2) weights,
    already transposed for the batch-in-lanes layout.

    Inputs (PyTorch layout): w1s (3, H, C), b1s (3, H), w2s (3, K, H),
    b2s (3, K).  Returns W1cat (3H, C), b1cat (3H, 1), W2bd (3K, 3H),
    b2cat (3K, 1) in float32.
    """
    w1s = w1s.astype(jnp.float32)
    b1s = b1s.astype(jnp.float32)
    w2s = w2s.astype(jnp.float32)
    b2s = b2s.astype(jnp.float32)
    H = w1s.shape[1]
    K = w2s.shape[1]
    # Layer 1: stack heads along the output (hidden) axis -> rows.
    w1_cat = jnp.concatenate([w1s[0], w1s[1], w1s[2]], axis=0)            # (3H, C)
    b1_cat = jnp.concatenate([b1s[0], b1s[1], b1s[2]], axis=0)[:, None]   # (3H, 1)
    # Layer 2: block-diagonal so each head's hidden slice only feeds its own K.
    z = jnp.zeros((K, H), jnp.float32)
    w2_bd = jnp.block([[w2s[0], z, z],
                       [z, w2s[1], z],
                       [z, z, w2s[2]]])                                    # (3K, 3H)
    b2_cat = jnp.concatenate([b2s[0], b2s[1], b2s[2]], axis=0)[:, None]    # (3K, 1)
    return w1_cat, b1_cat, w2_bd, b2_cat


def _pick_batch_tile(B, tile_b):
    """Lane-axis batch tile: multiple of 128, and at least ~4 grid steps when B
    is large so the 'parallel' axis can be sharded across v7x's 2 TCs."""
    quarter = -(-B // 4)                      # cdiv(B, 4)
    quarter = -(-quarter // 128) * 128        # round up to 128 lanes
    tb = min(tile_b, quarter)
    if tb >= B:
        return B                              # single full-extent tile (always legal)
    return max(128, (tb // 128) * 128)


@functools.partial(jax.jit, static_argnames=("tile_b",))
def parameter_model_nn_not_shared(x, w1s, b1s, w2s, b2s, *, tile_b=8192):
    """x: (B, C); w1s: (3, H, C); b1s: (3, H); w2s: (3, K, H); b2s: (3, K)."""
    B, C = x.shape
    H = w1s.shape[1]
    K = w2s.shape[1]
    out_dtype = x.dtype

    w1_cat, b1_cat, w2_bd, b2_cat = _fuse_params(w1s, b1s, w2s, b2s)

    tb = _pick_batch_tile(B, tile_b)
    grid = (pl.cdiv(B, tb),)

    # Lane-dense layout: one cheap XLA transpose outside the kernel.
    xt = x.T                                                  # (C, B)

    in_bytes = B * C * jnp.dtype(x.dtype).itemsize
    out_bytes = B * 3 * K * jnp.dtype(out_dtype).itemsize
    w_bytes = 4 * (w1_cat.size + b1_cat.size + w2_bd.size + b2_cat.size)
    cost = pl.CostEstimate(
        flops=2 * B * (C * 3 * H + 3 * H * 3 * K),
        transcendentals=B * 3 * H,
        bytes_accessed=in_bytes + out_bytes + w_bytes,
    )

    out_t = pl.pallas_call(
        _fused_mlp_kernel,
        out_shape=jax.ShapeDtypeStruct((3 * K, B), out_dtype),
        grid_spec=pltpu.PrefetchScalarGridSpec(
            num_scalar_prefetch=0,
            grid=grid,
            in_specs=[
                pl.BlockSpec((C, tb), lambda i: (0, i)),            # x^T: streamed
                pl.BlockSpec((3 * H, C), lambda i: (0, 0)),         # weights: resident
                pl.BlockSpec((3 * H, 1), lambda i: (0, 0)),
                pl.BlockSpec((3 * K, 3 * H), lambda i: (0, 0)),
                pl.BlockSpec((3 * K, 1), lambda i: (0, 0)),
            ],
            out_specs=pl.BlockSpec((3 * K, tb), lambda i: (0, i)),  # lane-dense store
        ),
        compiler_params=pltpu.CompilerParams(
            dimension_semantics=("parallel",),   # shard batch across TCs on v7x
            vmem_limit_bytes=32 << 20,           # tiles are a few MiB; safe everywhere
        ),
        cost_estimate=cost,
    )(xt, w1_cat, b1_cat, w2_bd, b2_cat)

    return out_t.T                                             # back to (B, 3K)


def _init_params(key, context_size, K, hidden_size):
    """Deterministic init mimicking torch.nn.Linear default (+-1/sqrt(fan_in)),
    stored in PyTorch layout: W1 (H, C), b1 (H,), W2 (K, H), b2 (K,)."""
    ks = jax.random.split(key, 12)
    lim1 = 1.0 / jnp.sqrt(context_size)
    lim2 = 1.0 / jnp.sqrt(hidden_size)
    w1s, b1s, w2s, b2s = [], [], [], []
    for h in range(3):
        w1 = jax.random.uniform(ks[4 * h + 0], (hidden_size, context_size),
                                jnp.float32, -lim1, lim1)
        b1 = jax.random.uniform(ks[4 * h + 1], (hidden_size,),
                                jnp.float32, -lim1, lim1)
        w2 = jax.random.uniform(ks[4 * h + 2], (K, hidden_size),
                                jnp.float32, -lim2, lim2)
        b2 = jax.random.uniform(ks[4 * h + 3], (K,),
                                jnp.float32, -lim2, lim2)
        w1s.append(w1); b1s.append(b1); w2s.append(w2); b2s.append(b2)
    return (jnp.stack(w1s), jnp.stack(b1s), jnp.stack(w2s), jnp.stack(b2s))


def _reference(x, w1s, b1s, w2s, b2s):
    """Unfused per-head reference, mirroring the PyTorch forward exactly."""
    x = x.astype(jnp.float32)
    outs = []
    for h in range(3):
        hid = jax.nn.sigmoid(x @ w1s[h].T + b1s[h])
        outs.append(hid @ w2s[h].T + b2s[h])
    return jnp.concatenate(outs, axis=1)


if __name__ == "__main__":
    # Small shapes consistent with the module's forward: x is (batch, context_size).
    B, context_size, K, hidden_size = 8, 16, 4, 3

    key = jax.random.PRNGKey(0)
    kx, kp = jax.random.split(key)
    x = jax.random.normal(kx, (B, context_size), jnp.float32)
    w1s, b1s, w2s, b2s = _init_params(kp, context_size, K, hidden_size)

    out = parameter_model_nn_not_shared(x, w1s, b1s, w2s, b2s)
    out = jax.block_until_ready(out)
    ref = _reference(x, w1s, b1s, w2s, b2s)
    assert out.shape == (B, 3 * K), out.shape
    assert jnp.allclose(out, ref, atol=1e-5, rtol=1e-5), "mismatch vs reference"

    # Gridded path: multi-tile lane-dense batch, tile chosen so grid has >=4 steps.
    B2 = 4096
    x2 = jax.random.normal(jax.random.PRNGKey(1), (B2, context_size), jnp.float32)
    out2 = jax.block_until_ready(
        parameter_model_nn_not_shared(x2, w1s, b1s, w2s, b2s))
    ref2 = _reference(x2, w1s, b1s, w2s, b2s)
    assert out2.shape == (B2, 3 * K), out2.shape
    assert jnp.allclose(out2, ref2, atol=1e-5, rtol=1e-5), "mismatch (gridded)"

    # Partial last tile: B not a multiple of the 128-lane tile.
    B3 = 1111
    x3 = jax.random.normal(jax.random.PRNGKey(2), (B3, context_size), jnp.float32)
    out3 = jax.block_until_ready(
        parameter_model_nn_not_shared(x3, w1s, b1s, w2s, b2s))
    ref3 = _reference(x3, w1s, b1s, w2s, b2s)
    assert out3.shape == (B3, 3 * K), out3.shape
    assert jnp.allclose(out3, ref3, atol=1e-5, rtol=1e-5), "mismatch (partial tile)"

    # bf16 streaming path: input stays bf16 over HBM, f32 accumulate in-kernel,
    # output rounded back to bf16 (loose tolerance covers the final store round).
    x4 = x2.astype(jnp.bfloat16)
    out4 = jax.block_until_ready(
        parameter_model_nn_not_shared(x4, w1s, b1s, w2s, b2s))
    assert out4.dtype == jnp.bfloat16 and out4.shape == (B2, 3 * K)
    ref4 = _reference(x4, w1s, b1s, w2s, b2s)
    assert jnp.allclose(out4.astype(jnp.float32), ref4, atol=5e-2), "mismatch (bf16)"

    print("KERNEL_OK")
</pallas_src>

<mosaic_0001>
module attributes {stable_mosaic.version = 11 : i64} {
  func.func @_fused_mlp_kernel(%arg0: i32, %arg1: memref<16x8xf32, #tpu.memory_space<vmem>>, %arg2: memref<9x16xf32, #tpu.memory_space<vmem>>, %arg3: memref<9x1xf32, #tpu.memory_space<vmem>>, %arg4: memref<12x9xf32, #tpu.memory_space<vmem>>, %arg5: memref<12x1xf32, #tpu.memory_space<vmem>>, %arg6: memref<12x8xf32, #tpu.memory_space<vmem>>) attributes {dimension_semantics = [#tpu.dimension_semantics<parallel>], iteration_bounds = array<i64: 1>, scalar_prefetch = 0 : i64, scratch_operands = 0 : i64, tpu.core_type = #tpu.core_type<tc>, window_params = [{transform_indices = @transform_0, window_bounds = array<i64: 16, 8>}, {pipeline_mode = #tpu.pipeline_mode<synchronous>, transform_indices = @transform_1, window_bounds = array<i64: 9, 16>}, {pipeline_mode = #tpu.pipeline_mode<synchronous>, transform_indices = @transform_2, window_bounds = array<i64: 9, 1>}, {pipeline_mode = #tpu.pipeline_mode<synchronous>, transform_indices = @transform_3, window_bounds = array<i64: 12, 9>}, {pipeline_mode = #tpu.pipeline_mode<synchronous>, transform_indices = @transform_4, window_bounds = array<i64: 12, 1>}, {transform_indices = @transform_5, window_bounds = array<i64: 12, 8>}]} {
    %c0 = arith.constant 0 : index
    %c0_0 = arith.constant 0 : index
    %0 = vector.load %arg1[%c0, %c0_0] : memref<16x8xf32, #tpu.memory_space<vmem>>, vector<16x8xf32>
    %c0_1 = arith.constant 0 : index
    %c0_2 = arith.constant 0 : index
    %1 = vector.load %arg2[%c0_1, %c0_2] : memref<9x16xf32, #tpu.memory_space<vmem>>, vector<9x16xf32>
    %cst = arith.constant dense<0.000000e+00> : vector<9x8xf32>
    %2 = tpu.matmul %1, %0, %cst {dimension_numbers = #tpu.dot_dimension_numbers<[1], [0], [0], [1], [0, 0, 1, 1], [], []>} : vector<9x16xf32>, vector<16x8xf32>, vector<9x8xf32> -> vector<9x8xf32>
    %c0_3 = arith.constant 0 : index
    %c0_4 = arith.constant 0 : index
    %3 = vector.load %arg3[%c0_3, %c0_4] : memref<9x1xf32, #tpu.memory_space<vmem>>, vector<9x1xf32>
    %4 = vector.broadcast %3 : vector<9x1xf32> to vector<9x8xf32>
    %5 = arith.addf %2, %4 : vector<9x8xf32>
    %6 = arith.negf %5 : vector<9x8xf32>
    %7 = math.exp %6 : vector<9x8xf32>
    %cst_5 = arith.constant 1.000000e+00 : f32
    %8 = vector.broadcast %cst_5 : f32 to vector<9x8xf32>
    %9 = arith.addf %8, %7 : vector<9x8xf32>
    %10 = arith.divf %8, %9 : vector<9x8xf32>
    %c0_6 = arith.constant 0 : index
    %c0_7 = arith.constant 0 : index
    %11 = vector.load %arg4[%c0_6, %c0_7] : memref<12x9xf32, #tpu.memory_space<vmem>>, vector<12x9xf32>
    %cst_8 = arith.constant dense<0.000000e+00> : vector<12x8xf32>
    %12 = tpu.matmul %11, %10, %cst_8 {dimension_numbers = #tpu.dot_dimension_numbers<[1], [0], [0], [1], [0, 0, 1, 1], [], []>} : vector<12x9xf32>, vector<9x8xf32>, vector<12x8xf32> -> vector<12x8xf32>
    %c0_9 = arith.constant 0 : index
    %c0_10 = arith.constant 0 : index
    %13 = vector.load %arg5[%c0_9, %c0_10] : memref<12x1xf32, #tpu.memory_space<vmem>>, vector<12x1xf32>
    %14 = vector.broadcast %13 : vector<12x1xf32> to vector<12x8xf32>
    %15 = arith.addf %12, %14 : vector<12x8xf32>
    %c0_11 = arith.constant 0 : index
    %c0_12 = arith.constant 0 : index
    %16 = vector.load %arg6[%c0_11, %c0_12] : memref<12x8xf32, #tpu.memory_space<vmem>>, vector<12x8xf32>
    tpu.vector_store %arg6[%c0_11, %c0_12], %15 {strides = array<i32>} : memref<12x8xf32, #tpu.memory_space<vmem>>, vector<12x8xf32>,
    return
  }
  func.func @transform_0(%arg0: i32) -> (i32, i32) {
    %c0_i32 = arith.constant 0 : i32
    %c0_i32_0 = arith.constant 0 : i32
    return %c0_i32, %arg0 : i32, i32
  }
  func.func @transform_1(%arg0: i32) -> (i32, i32) {
    %c0_i32 = arith.constant 0 : i32
    %c0_i32_0 = arith.constant 0 : i32
    %c0_i32_1 = arith.constant 0 : i32
    return %c0_i32, %c0_i32_0 : i32, i32
  }
  func.func @transform_2(%arg0: i32) -> (i32, i32) {
    %c0_i32 = arith.constant 0 : i32
    %c0_i32_0 = arith.constant 0 : i32
    %c0_i32_1 = arith.constant 0 : i32
    return %c0_i32, %c0_i32_0 : i32, i32
  }
  func.func @transform_3(%arg0: i32) -> (i32, i32) {
    %c0_i32 = arith.constant 0 : i32
    %c0_i32_0 = arith.constant 0 : i32
    %c0_i32_1 = arith.constant 0 : i32
    return %c0_i32, %c0_i32_0 : i32, i32
  }
  func.func @transform_4(%arg0: i32) -> (i32, i32) {
    %c0_i32 = arith.constant 0 : i32
    %c0_i32_0 = arith.constant 0 : i32
    %c0_i32_1 = arith.constant 0 : i32
    return %c0_i32, %c0_i32_0 : i32, i32
  }
  func.func @transform_5(%arg0: i32) -> (i32, i32) {
    %c0_i32 = arith.constant 0 : i32
    %c0_i32_0 = arith.constant 0 : i32
    return %c0_i32, %arg0 : i32, i32
  }
}

</mosaic_0001>

<llo_original>
// kernel: parameter_model_nn_not_shared.1
$region0: #{parameter_model_nn_not_shared.1}
  #allocation0 [shape = 'u32[]', space=smem, size = 0x4, offset = 0x4, fixed_abs, tag = 'smem constant byte address 0x4 - core index']
  #allocation1 [shape = 'u32[144,128]{1,0:T(1,128)}', space=vmem, size = 0x12000, scoped, tag = 'internal scratch']
  %s0 = inlined_call_operand.vmem [shape: f32[16,8], index: 0, kind: input, shape index: {}]
  %s1 = inlined_call_operand.vmem [shape: f32[9,16], index: 1, kind: input, shape index: {}]
  %s2 = inlined_call_operand.vmem [shape: f32[9,1], index: 2, kind: input, shape index: {}]
  %s3 = inlined_call_operand.vmem [shape: f32[12,9], index: 3, kind: input, shape index: {}]
  %s4 = inlined_call_operand.vmem [shape: f32[12,1], index: 4, kind: input, shape index: {}]
  %s5 = inlined_call_operand.vmem [shape: f32[12,8], index: 5, kind: output, shape index: {}]
  %s6 = sld [smem:[#allocation0]]
  $region30: #{parameter_model_nn_not_shared.1} parent=0
    _
  %s8 = ssub.s32 1, %s6
  %s9 = scalar_select 0, %s8, %s6
  // Predicated region
  $region2: #{parameter_model_nn_not_shared.1} parent=0 // pred_check
    _
  $region3: #{parameter_model_nn_not_shared.1} parent=0 // pred_check_branch
    %11 = sbr.rel (0) target = $region5
  $region4: #{parameter_model_nn_not_shared.1} parent=0 // pred_region
    _
  $region5: #{parameter_model_nn_not_shared.1} parent=0 // pred_fallthru
    _
  // Predicated region
  $region6: #{parameter_model_nn_not_shared.1} parent=0 // pred_check
    _
  $region7: #{parameter_model_nn_not_shared.1} parent=0 // pred_check_branch
    %13 = sbr.rel (0) target = $region9
  $region8: #{parameter_model_nn_not_shared.1} parent=0 // pred_region
    _
  $region9: #{parameter_model_nn_not_shared.1} parent=0 // pred_fallthru
    _
  // Predicated region
  $region10: #{parameter_model_nn_not_shared.1} parent=0 // pred_check
    _
  $region11: #{parameter_model_nn_not_shared.1} parent=0 // pred_check_branch
    %15 = sbr.rel (0) target = $region13
  $region12: #{parameter_model_nn_not_shared.1} parent=0 // pred_region
    _
  $region13: #{parameter_model_nn_not_shared.1} parent=0 // pred_fallthru
    _
  // Predicated region
  $region14: #{parameter_model_nn_not_shared.1} parent=0 // pred_check
    _
  $region15: #{parameter_model_nn_not_shared.1} parent=0 // pred_check_branch
    %17 = sbr.rel (0) target = $region17
  $region16: #{parameter_model_nn_not_shared.1} parent=0 // pred_region
    _
  $region17: #{parameter_model_nn_not_shared.1} parent=0 // pred_fallthru
    _
  // Predicated region
  $region18: #{parameter_model_nn_not_shared.1} parent=0 // pred_check
    _
  $region19: #{parameter_model_nn_not_shared.1} parent=0 // pred_check_branch
    %19 = sbr.rel (0) target = $region21
  $region20: #{parameter_model_nn_not_shared.1} parent=0 // pred_region
    _
  $region21: #{parameter_model_nn_not_shared.1} parent=0 // pred_fallthru
    _
  %v20 = vld [vmem:[%s0] sm:$0xff]
  %v21 = vld [vmem:[%s0 + $0x8] sm:$0xff]
  %v22 = vld [vmem:[%s1] sm:$0xff]
  %v23 = vld [vmem:[%s1 + $0x8] sm:$0x1]
  %v24 = vld [vmem:[%s2] sm:$0xff]
  %v25 = vld [vmem:[%s2 + $0x8] sm:$0x1]
  %27 = vset.pattern.permute.xlu0 0
  %28 = vperm.xlu0 %27, %v24
  %v29 = vpop.permute.xlu0 %28
  %32 = vset.pattern.permute.xlu0 0
  %33 = vperm.xlu0 %32, %v25
  %v34 = vpop.permute.xlu0 %33
  %vm36 = vcmask 130048
  %v38 = vsel %vm36, %v22, 0
  %v41 = vsel %vm36, %v23, 0
  %43 = vmatprep.subr.mxu0 0.0
  %44 = vmatpush1.msra.mxu0 %v20
  %45 = vmatprep.subr.mxu0 0.0
  %46 = vmatpush1.msra.mxu0 %v21
  %47 = vmatprep.subr.mxu0 0.0
  %48 = vmatpush1.msra.mxu0 0.0
  %49 = vmatprep.subr.mxu0 0.0
  %50 = vmatpush1.msra.mxu0 0.0
  %51 = vmatprep.subr.mxu0 0.0
  %52 = vmatpush1.msra.mxu0 0.0
  %53 = vmatprep.subr.mxu0 0.0
  %54 = vmatpush1.msra.mxu0 0.0
  %55 = vmatprep.subr.mxu0 0.0
  %56 = vmatpush1.msra.mxu0 0.0
  %57 = vmatprep.subr.mxu0 0.0
  %58 = vmatpush1.msra.mxu0 0.0
  %59 = vmatprep.subr.mxu0 0.0
  %60 = vmatpush1.msra.mxu0 0.0
  %61 = vmatprep.subr.mxu0 0.0
  %62 = vmatpush1.msra.mxu0 0.0
  %63 = vmatprep.subr.mxu0 0.0
  %64 = vmatpush1.msra.mxu0 0.0
  %65 = vmatprep.subr.mxu0 0.0
  %66 = vmatpush1.msra.mxu0 0.0
  %67 = vmatprep.subr.mxu0 0.0
  %68 = vmatpush1.msra.mxu0 0.0
  %69 = vmatprep.subr.mxu0 0.0
  %70 = vmatpush1.msra.mxu0 0.0
  %71 = vmatprep.subr.mxu0 0.0
  %72 = vmatpush1.msra.mxu0 0.0
  %73 = vmatprep.subr.mxu0 0.0
  %74 = vmatpush1.msra.mxu0 0.0
  %75 = vmatprep.subr.mxu0 0.0
  %76 = vmatpush1.msra.mxu0 0.0
  %77 = vmatprep.subr.mxu0 0.0
  %78 = vmatpush1.msra.mxu0 0.0
  %79 = vmatprep.subr.mxu0 0.0
  %80 = vmatpush1.msra.mxu0 0.0
  %81 = vmatprep.subr.mxu0 0.0
  %82 = vmatpush1.msra.mxu0 0.0
  %83 = vmatprep.subr.mxu0 0.0
  %84 = vmatpush1.msra.mxu0 0.0
  %85 = vmatprep.subr.mxu0 0.0
  %86 = vmatpush1.msra.mxu0 0.0
  %87 = vmatprep.subr.mxu0 0.0
  %88 = vmatpush1.msra.mxu0 0.0
  %89 = vmatprep.subr.mxu0 0.0
  %90 = vmatpush1.msra.mxu0 0.0
  %91 = vmatprep.subr.mxu0 0.0
  %92 = vmatpush1.msra.mxu0 0.0
  %93 = vmatprep.subr.mxu0 0.0
  %94 = vmatpush1.msra.mxu0 0.0
  %95 = vmatprep.subr.mxu0 0.0
  %96 = vmatpush1.msra.mxu0 0.0
  %97 = vmatprep.subr.mxu0 0.0
  %98 = vmatpush1.msra.mxu0 0.0
  %99 = vmatprep.subr.mxu0 0.0
  %100 = vmatpush1.msra.mxu0 0.0
  %101 = vmatprep.subr.mxu0 0.0
  %102 = vmatpush1.msra.mxu0 0.0
  %103 = vmatprep.subr.mxu0 0.0
  %104 = vmatpush1.msra.mxu0 0.0
  %105 = vmatprep.subr.mxu0 0.0
  %106 = vmatpush1.msra.mxu0 0.0
  %107 = vmatprep.mubr.f32.mxu0 0.0
  %108 = vmatmul.mubr.f32.gmra.mrb[0].mxu0 %v38
  %v109 = vpop.f32.mrb[0].mxu0
  %v110 = vadd.f32 %v29, %v109
  %v111 = vpop.f32.mrb[0].mxu0
  %112 = vmatprep.mubr.f32.mxu0 0.0
  %113 = vmatmul.mubr.f32.gmra.mrb[0].mxu0 %v41
  %v114 = vpop.f32.mrb[0].mxu0
  %v115 = vadd.f32 %v34, %v114
  %v116 = vpop.f32.mrb[0].mxu0
  %117 = vdwg.mxu0
  %v118 = vxor.u32 %v110, 2147483648
  %v119 = vxor.u32 %v115, 2147483648
  %v120 = vmul.f32 %v118, 1.442695
  %v121 = vpow.pop %v120
  %v122 = vmul.f32 %v119, 1.442695
  %v123 = vpow.pop %v122
  %v124 = vadd.f32 %v121, 1.0
  %v125 = vadd.f32 %v123, 1.0
  %v126 = vrcp.pop %v124
  %v127 = vmul.f32 1.0, %v126
  %v128 = vrcp.pop %v125
  %v129 = vmul.f32 1.0, %v128
  %v130 = vld [vmem:[%s3] sm:$0xff]
  %v131 = vld [vmem:[%s3 + $0x8] sm:$0xf]
  %v132 = vld [vmem:[%s4] sm:$0xff]
  %v133 = vld [vmem:[%s4 + $0x8] sm:$0xf]
  %135 = vset.pattern.permute.xlu0 0
  %136 = vperm.xlu0 %135, %v132
  %v137 = vpop.permute.xlu0 %136
  %140 = vset.pattern.permute.xlu0 0
  %141 = vperm.xlu0 %140, %v133
  %v142 = vpop.permute.xlu0 %141
  %vm144 = vcmask 72704
  %v146 = vsel %vm144, %v130, 0
  %v149 = vsel %vm144, %v131, 0
  %vm151 = vcmask 1040384
  %v153 = vsel %vm151, %v129, 0
  %155 = vmatprep.subr.mxu0 0.0
  %156 = vmatpush1.msra.mxu0 %v127
  %157 = vmatprep.subr.mxu0 0.0
  %158 = vmatpush1.msra.mxu0 %v153
  %159 = vmatprep.subr.mxu0 0.0
  %160 = vmatpush1.msra.mxu0 0.0
  %161 = vmatprep.subr.mxu0 0.0
  %162 = vmatpush1.msra.mxu0 0.0
  %163 = vmatprep.subr.mxu0 0.0
  %164 = vmatpush1.msra.mxu0 0.0
  %165 = vmatprep.subr.mxu0 0.0
  %166 = vmatpush1.msra.mxu0 0.0
  %167 = vmatprep.subr.mxu0 0.0
  %168 = vmatpush1.msra.mxu0 0.0
  %169 = vmatprep.subr.mxu0 0.0
  %170 = vmatpush1.msra.mxu0 0.0
  %171 = vmatprep.subr.mxu0 0.0
  %172 = vmatpush1.msra.mxu0 0.0
  %173 = vmatprep.subr.mxu0 0.0
  %174 = vmatpush1.msra.mxu0 0.0
  %175 = vmatprep.subr.mxu0 0.0
  %176 = vmatpush1.msra.mxu0 0.0
  %177 = vmatprep.subr.mxu0 0.0
  %178 = vmatpush1.msra.mxu0 0.0
  %179 = vmatprep.subr.mxu0 0.0
  %180 = vmatpush1.msra.mxu0 0.0
  %181 = vmatprep.subr.mxu0 0.0
  %182 = vmatpush1.msra.mxu0 0.0
  %183 = vmatprep.subr.mxu0 0.0
  %184 = vmatpush1.msra.mxu0 0.0
  %185 = vmatprep.subr.mxu0 0.0
  %186 = vmatpush1.msra.mxu0 0.0
  %187 = vmatprep.subr.mxu0 0.0
  %188 = vmatpush1.msra.mxu0 0.0
  %189 = vmatprep.subr.mxu0 0.0
  %190 = vmatpush1.msra.mxu0 0.0
  %191 = vmatprep.subr.mxu0 0.0
  %192 = vmatpush1.msra.mxu0 0.0
  %193 = vmatprep.subr.mxu0 0.0
  %194 = vmatpush1.msra.mxu0 0.0
  %195 = vmatprep.subr.mxu0 0.0
  %196 = vmatpush1.msra.mxu0 0.0
  %197 = vmatprep.subr.mxu0 0.0
  %198 = vmatpush1.msra.mxu0 0.0
  %199 = vmatprep.subr.mxu0 0.0
  %200 = vmatpush1.msra.mxu0 0.0
  %201 = vmatprep.subr.mxu0 0.0
  %202 = vmatpush1.msra.mxu0 0.0
  %203 = vmatprep.subr.mxu0 0.0
  %204 = vmatpush1.msra.mxu0 0.0
  %205 = vmatprep.subr.mxu0 0.0
  %206 = vmatpush1.msra.mxu0 0.0
  %207 = vmatprep.subr.mxu0 0.0
  %208 = vmatpush1.msra.mxu0 0.0
  %209 = vmatprep.subr.mxu0 0.0
  %210 = vmatpush1.msra.mxu0 0.0
  %211 = vmatprep.subr.mxu0 0.0
  %212 = vmatpush1.msra.mxu0 0.0
  %213 = vmatprep.subr.mxu0 0.0
  %214 = vmatpush1.msra.mxu0 0.0
  %215 = vmatprep.subr.mxu0 0.0
  %216 = vmatpush1.msra.mxu0 0.0
  %217 = vmatprep.subr.mxu0 0.0
  %218 = vmatpush1.msra.mxu0 0.0
  %219 = vmatprep.mubr.f32.mxu0 0.0
  %220 = vmatmul.mubr.f32.gmra.mrb[0].mxu0 %v146
  %v221 = vpop.f32.mrb[0].mxu0
  %v222 = vadd.f32 %v137, %v221
  %v223 = vpop.f32.mrb[0].mxu0
  %224 = vmatprep.mubr.f32.mxu0 0.0
  %225 = vmatmul.mubr.f32.gmra.mrb[0].mxu0 %v149
  %v226 = vpop.f32.mrb[0].mxu0
  %v227 = vadd.f32 %v142, %v226
  %v228 = vpop.f32.mrb[0].mxu0
  %229 = vdwg.mxu0
  %vm230 = vcmask 64512
  %231 = vst.msk [vmem:[%s5] sm:$0xff] %vm230, %v222
  %vm232 = vcmask 60416
  %233 = vst.msk [vmem:[%s5 + $0x8] sm:$0xf] %vm232, %v227
  // Predicated region
  $region22: #{parameter_model_nn_not_shared.1} parent=0 // pred_check
    _
  $region23: #{parameter_model_nn_not_shared.1} parent=0 // pred_check_branch
    %235 = sbr.rel (0) target = $region25
  $region24: #{parameter_model_nn_not_shared.1} parent=0 // pred_region
    _
  $region25: #{parameter_model_nn_not_shared.1} parent=0 // pred_fallthru
    _
  // Predicated region
  $region26: #{parameter_model_nn_not_shared.1} parent=0 // pred_check
    _
  $region27: #{parameter_model_nn_not_shared.1} parent=0 // pred_check_branch
    %237 = sbr.rel (0) target = $region29
  $region28: #{parameter_model_nn_not_shared.1} parent=0 // pred_region
    _
  $region29: #{parameter_model_nn_not_shared.1} parent=0 // pred_fallthru
    _

</llo_original>
